<compile_context>
chip_gen: v7x
topology: tpu7x:2x2x1
jax: 0.10.0
libtpu: 0.0.40
codegen_flags: <defaults>
</compile_context>

<pallas_src>
import functools

import jax
import jax.numpy as jnp
from jax.experimental import pallas as pl
from jax.experimental.pallas import tpu as pltpu


def _round_up(x: int, m: int) -> int:
    return ((x + m - 1) // m) * m


def _cdiv(a: int, b: int) -> int:
    return (a + b - 1) // b


_VMEM_LIMIT = 48 * 1024 * 1024       # fits v7x (64 MiB physical); ample on v5e/v6e
_RESIDENT_BUDGET = 40 * 1024 * 1024  # working-set gate for the weight-resident path


# ---------------------------------------------------------------------------
# Kernels
# ---------------------------------------------------------------------------

def _reader_resident_kernel(x_ref, w_ref, b_ref, o_ref):
    # Weight-resident path: grid over M only; W/b blocks constant -> DMA'd once.
    o_ref[...] = (
        jnp.dot(x_ref[...], w_ref[...], preferred_element_type=jnp.float32)
        + b_ref[...]
    ).astype(o_ref.dtype)


def _reader_tiled_f32out_kernel(x_ref, w_ref, b_ref, o_ref):
    # f32 output: accumulate directly into the output block (resident across K).
    k = pl.program_id(2)

    @pl.when(k == 0)
    def _init():
        o_ref[...] = jnp.broadcast_to(b_ref[...], o_ref.shape)

    o_ref[...] += jnp.dot(
        x_ref[...], w_ref[...], preferred_element_type=jnp.float32
    )


def _reader_tiled_acc_kernel(x_ref, w_ref, b_ref, o_ref, acc_ref):
    # Generic output dtype: f32 VMEM accumulator, finalize on the last K step.
    k = pl.program_id(2)

    @pl.when(k == 0)
    def _init():
        acc_ref[...] = jnp.zeros_like(acc_ref)

    acc_ref[...] += jnp.dot(
        x_ref[...], w_ref[...], preferred_element_type=jnp.float32
    )

    @pl.when(k == pl.num_programs(2) - 1)
    def _finalize():
        o_ref[...] = (acc_ref[...] + b_ref[...]).astype(o_ref.dtype)


# ---------------------------------------------------------------------------
# Wrapper
# ---------------------------------------------------------------------------

@functools.partial(
    jax.jit,
    static_argnames=("compute_dtype", "tm", "tn", "tk", "force_tiled"),
)
def reader_forward(x, w, b, *, compute_dtype=jnp.bfloat16,
                   tm=512, tn=1024, tk=1024, force_tiled=False):
    """Reader forward: linear projection of hidden states.

    x : (B, S, H)   w : (H, O)   b : (O,)
    compute_dtype: operand dtype for the MXU matmul (default bf16; accumulation
                   is always f32 and the output keeps x's original dtype).
    returns (B, S, O) in x's original dtype.
    """
    B, S, H = x.shape
    O = w.shape[1]
    M = B * S
    out_dtype = x.dtype

    # Validate / round user-supplied tiles to hardware-friendly multiples.
    tm = max(8, _round_up(int(tm), 8))
    tn = max(128, _round_up(int(tn), 128))
    tk = max(128, _round_up(int(tk), 128))

    # Operand cast first (then any padding copies the narrower dtype).
    if compute_dtype is not None and x.dtype != compute_dtype:
        x = x.astype(compute_dtype)
    if compute_dtype is not None and w.dtype != compute_dtype:
        w = w.astype(compute_dtype)
    in_size = x.dtype.itemsize
    out_size = out_dtype.itemsize

    x2d = x.reshape(M, H)                       # metadata-only reshape
    b_row = b.reshape(1, O).astype(jnp.float32)  # tiny; pre-cast on host

    # M tiling: never pad M on the host; Pallas masks the partial edge block.
    tm = min(tm, _round_up(M, 8))

    flops = 2 * M * H * O
    bytes_accessed = M * H * in_size + H * O * in_size + O * 4 + M * O * out_size
    cost = pl.CostEstimate(
        flops=flops, bytes_accessed=bytes_accessed, transcendentals=0
    )

    # ---- Fast path: weight-resident (tk = H, tn = O), x / y streamed once. ----
    resident_bytes = (
        2 * H * O * in_size        # weight block (assume double-buffered)
        + 2 * O * 4                # bias
        + 2 * tm * H * in_size     # activation tiles
        + 2 * tm * O * out_size    # output tiles
    )
    if (not force_tiled) and resident_bytes <= _RESIDENT_BUDGET:
        # Make sure the v7x megacore gets >= 2 parallel M tiles when possible.
        if _cdiv(M, tm) < 2 and M > 8:
            tm = min(tm, max(8, _round_up(_cdiv(M, 2), 8)))
        grid = (_cdiv(M, tm),)
        out2d = pl.pallas_call(
            _reader_resident_kernel,
            out_shape=jax.ShapeDtypeStruct((M, O), out_dtype),
            grid=grid,
            in_specs=[
                pl.BlockSpec((tm, H), lambda i: (i, 0)),   # activations (streamed)
                pl.BlockSpec((H, O), lambda i: (0, 0)),    # weights (resident)
                pl.BlockSpec((1, O), lambda i: (0, 0)),    # bias (resident, f32)
            ],
            out_specs=pl.BlockSpec((tm, O), lambda i: (i, 0)),
            compiler_params=pltpu.CompilerParams(
                dimension_semantics=("parallel",),
                vmem_limit_bytes=_VMEM_LIMIT,
            ),
            cost_estimate=cost,
        )(x2d, w, b_row)
        return out2d.reshape(B, S, O)

    # ---- General path: M/N/K tiled grid, f32 accumulation across K. ----
    # N tiling: full-dim block when O fits in one tile (no host padding of O).
    if O <= tn:
        tn = O

    # K tiling: tk must be a multiple of 128 that exactly divides the (possibly
    # zero-padded) reduction extent -- garbage in a K tail would corrupt results.
    Hp = _round_up(H, 128)
    cand = Hp // 128
    best = 1
    for d in range(1, cand + 1):
        if cand % d == 0 and d * 128 <= tk:
            best = d
    tk = best * 128

    if Hp != H:  # pad (already-cast) operands along the reduction dim only
        x2d = jnp.pad(x2d, ((0, 0), (0, Hp - H)))
        w = jnp.pad(w, ((0, Hp - H), (0, 0)))

    grid = (_cdiv(M, tm), _cdiv(O, tn), Hp // tk)

    if out_dtype == jnp.float32:
        kernel = _reader_tiled_f32out_kernel
        scratch = ()
    else:
        kernel = _reader_tiled_acc_kernel
        scratch = (pltpu.VMEM((tm, tn), jnp.float32),)

    out2d = pl.pallas_call(
        kernel,
        out_shape=jax.ShapeDtypeStruct((M, O), out_dtype),
        grid=grid,
        in_specs=[
            pl.BlockSpec((tm, tk), lambda i, j, k: (i, k)),   # activations
            pl.BlockSpec((tk, tn), lambda i, j, k: (k, j)),   # weights
            pl.BlockSpec((1, tn), lambda i, j, k: (0, j)),    # bias (f32)
        ],
        out_specs=pl.BlockSpec((tm, tn), lambda i, j, k: (i, j)),
        scratch_shapes=scratch,
        compiler_params=pltpu.CompilerParams(
            dimension_semantics=("parallel", "parallel", "arbitrary"),
            vmem_limit_bytes=_VMEM_LIMIT,
        ),
        cost_estimate=cost,
    )(x2d, w, b_row)
    return out2d.reshape(B, S, O)


# ---------------------------------------------------------------------------
# Demo / self-test
# ---------------------------------------------------------------------------

if __name__ == "__main__":
    key = jax.random.PRNGKey(0)

    # --- Small reader-head shapes (weight-resident fast path). ---
    B, S, H, O = 2, 8, 32, 32
    kx, kw, kb = jax.random.split(key, 3)
    x = jax.random.normal(kx, (B, S, H), dtype=jnp.float32)
    # Deterministic synthetic parameters (no checkpoint load).
    w = jax.random.normal(kw, (H, O), dtype=jnp.float32) * 0.02
    b = jax.random.normal(kb, (O,), dtype=jnp.float32) * 0.02

    ref = jnp.einsum("bsh,ho->bso", x, w) + b

    # Default path: bf16 operands, f32 accumulation (looser numerical check).
    out = jax.block_until_ready(reader_forward(x, w, b))
    assert out.shape == (B, S, O)
    assert out.dtype == x.dtype
    assert jnp.allclose(out, ref, atol=5e-2, rtol=5e-2)

    # Explicit f32 operands (tight numerical check).
    out_f32 = jax.block_until_ready(
        reader_forward(x, w, b, compute_dtype=jnp.float32)
    )
    assert jnp.allclose(out_f32, ref, atol=1e-4, rtol=1e-4)

    # --- Ragged shapes, forced tiled path: exercises partial M/N edge blocks,
    #     K-dim zero padding (H=320 -> 384) and the f32 direct-accumulate kernel.
    B2, S2, H2, O2 = 2, 100, 320, 200
    kx2, kw2, kb2 = jax.random.split(jax.random.PRNGKey(1), 3)
    x2 = jax.random.normal(kx2, (B2, S2, H2), dtype=jnp.float32)
    w2 = jax.random.normal(kw2, (H2, O2), dtype=jnp.float32) * 0.02
    b2 = jax.random.normal(kb2, (O2,), dtype=jnp.float32) * 0.02
    ref2 = jnp.einsum("bsh,ho->bso", x2, w2) + b2

    out2 = jax.block_until_ready(
        reader_forward(x2, w2, b2, compute_dtype=jnp.float32,
                       tm=64, tn=128, tk=128, force_tiled=True)
    )
    assert out2.shape == (B2, S2, O2)
    assert jnp.allclose(out2, ref2, atol=1e-3, rtol=1e-3)

    # Tiled path with a non-f32 output dtype (f32-scratch accumulator kernel).
    out3 = jax.block_until_ready(
        reader_forward(x2.astype(jnp.bfloat16), w2, b2,
                       tm=64, tn=128, tk=128, force_tiled=True)
    )
    assert out3.dtype == jnp.bfloat16
    assert jnp.allclose(out3.astype(jnp.float32), ref2, atol=5e-2, rtol=5e-2)

    print("KERNEL_OK")
</pallas_src>

<mosaic_0001>
module attributes {stable_mosaic.version = 11 : i64} {
  func.func @_reader_resident_kernel(%arg0: i32, %arg1: memref<8x32xbf16, #tpu.memory_space<vmem>>, %arg2: memref<32x32xbf16, #tpu.memory_space<vmem>>, %arg3: memref<1x32xf32, #tpu.memory_space<vmem>>, %arg4: memref<8x32xf32, #tpu.memory_space<vmem>>) attributes {dimension_semantics = [#tpu.dimension_semantics<parallel>], iteration_bounds = array<i64: 2>, scalar_prefetch = 0 : i64, scratch_operands = 0 : i64, tpu.core_type = #tpu.core_type<tc>, window_params = [{transform_indices = @transform_0, window_bounds = array<i64: 8, 32>}, {pipeline_mode = #tpu.pipeline_mode<synchronous>, transform_indices = @transform_1, window_bounds = array<i64: 32, 32>}, {pipeline_mode = #tpu.pipeline_mode<synchronous>, transform_indices = @transform_2, window_bounds = array<i64: 1, 32>}, {transform_indices = @transform_3, window_bounds = array<i64: 8, 32>}]} {
    %c0 = arith.constant 0 : index
    %c0_0 = arith.constant 0 : index
    %0 = vector.load %arg1[%c0, %c0_0] : memref<8x32xbf16, #tpu.memory_space<vmem>>, vector<8x32xbf16>
    %c0_1 = arith.constant 0 : index
    %c0_2 = arith.constant 0 : index
    %1 = vector.load %arg2[%c0_1, %c0_2] : memref<32x32xbf16, #tpu.memory_space<vmem>>, vector<32x32xbf16>
    %cst = arith.constant dense<0.000000e+00> : vector<8x32xf32>
    %2 = tpu.matmul %0, %1, %cst {dimension_numbers = #tpu.dot_dimension_numbers<[1], [0], [0], [1], [0, 0, 1, 1], [], []>} : vector<8x32xbf16>, vector<32x32xbf16>, vector<8x32xf32> -> vector<8x32xf32>
    %c0_3 = arith.constant 0 : index
    %c0_4 = arith.constant 0 : index
    %3 = vector.load %arg3[%c0_3, %c0_4] : memref<1x32xf32, #tpu.memory_space<vmem>>, vector<1x32xf32>
    %4 = vector.broadcast %3 : vector<1x32xf32> to vector<8x32xf32>
    %5 = arith.addf %2, %4 : vector<8x32xf32>
    %c0_5 = arith.constant 0 : index
    %c0_6 = arith.constant 0 : index
    %6 = vector.load %arg4[%c0_5, %c0_6] : memref<8x32xf32, #tpu.memory_space<vmem>>, vector<8x32xf32>
    tpu.vector_store %arg4[%c0_5, %c0_6], %5 {strides = array<i32>} : memref<8x32xf32, #tpu.memory_space<vmem>>, vector<8x32xf32>,
    return
  }
  func.func @transform_0(%arg0: i32) -> (i32, i32) {
    %c0_i32 = arith.constant 0 : i32
    %c0_i32_0 = arith.constant 0 : i32
    return %arg0, %c0_i32 : i32, i32
  }
  func.func @transform_1(%arg0: i32) -> (i32, i32) {
    %c0_i32 = arith.constant 0 : i32
    %c0_i32_0 = arith.constant 0 : i32
    %c0_i32_1 = arith.constant 0 : i32
    return %c0_i32, %c0_i32_0 : i32, i32
  }
  func.func @transform_2(%arg0: i32) -> (i32, i32) {
    %c0_i32 = arith.constant 0 : i32
    %c0_i32_0 = arith.constant 0 : i32
    %c0_i32_1 = arith.constant 0 : i32
    return %c0_i32, %c0_i32_0 : i32, i32
  }
  func.func @transform_3(%arg0: i32) -> (i32, i32) {
    %c0_i32 = arith.constant 0 : i32
    %c0_i32_0 = arith.constant 0 : i32
    return %arg0, %c0_i32 : i32, i32
  }
}

</mosaic_0001>

<llo_original>
// kernel: reader_forward.1
$region0: #{reader_forward.1}
  #allocation0 [shape = 'u32[]', space=smem, size = 0x4, offset = 0x4, fixed_abs, tag = 'smem constant byte address 0x4 - core index']
  #allocation1 [shape = 'u32[144,128]{1,0:T(1,128)}', space=vmem, size = 0x12000, scoped, tag = 'internal scratch']
  %s0 = inlined_call_operand.vmem [shape: bf16[16,32], index: 0, kind: input, shape index: {}]
  %s1 = inlined_call_operand.vmem [shape: bf16[32,32], index: 1, kind: input, shape index: {}]
  %s2 = inlined_call_operand.vmem [shape: f32[1,32], index: 2, kind: input, shape index: {}]
  %s3 = inlined_call_operand.hbm [shape: f32[16,32], index: 3, kind: output, shape index: {}]
  %s4 = sld [smem:[#allocation0]]
  $region45: #{reader_forward.1} parent=0
    _
  %s6 = ssub.s32 1, %s4
  %s7 = scalar_select 0, %s6, %s4
  $region1: #{reader_forward.1} parent=0
    #allocation2 [shape = 'u8[8192]{0}', space=vmem, size = 0x2000, scoped, tag = 'output window, operand 0']
    #allocation3 [shape = 's32[2]{0}', space=sflag, size = 0x8, scoped, tag = 'scoped memory for reader_forward.1']
    %8 = vsyncpa [#allocation3], 0
    %s9 = scalar_lea.sflag [#allocation3], 1
    %10 = vsyncpa %s9, 0
    loop: start=0, step=1, limit=4
    $region2: #{reader_forward.1} parent=1 // loop_pre_header
      _
    $region3: #{reader_forward.1} parent=1 // loop_header
      %s12 = sphi 0, %s16
      %p13 = scmp.ge.s32.totalorder %s12, 4
      %s22 = sphi 0, %s24
      %s25 = sphi 0, %s22
      %s26 = sphi 0, %s25
      %s42 = sphi 0, %s26
      %s46 = sphi 0, %s46
      %s48 = sphi 0, %s46
      %s49 = sphi 0, %s48
      %s63 = sphi 0, %s49
      %s67 = sphi 0, %s67
      %s69 = sphi 0, %s67
      %s70 = sphi 0, %s69
      %s84 = sphi 0, %s70
      %s90 = sphi 0, %s92
      %s93 = sphi 0, %s90
      %s94 = sphi 0, %s93
      %s110 = sphi 0, %s94
    $region4: #{reader_forward.1} parent=1 // loop_header_branch
      %15 = sbr.rel (%p13) target = $region8
    $region5: #{reader_forward.1} parent=1 // loop_body
      %s17 = ssub.s32 %s12, 1
      %s18 = ssub.s32 %s12, 2
      %s19 = sadd.s32 %s12, 1
      %s20 = ssub.s32 %s12, %s19
      %p21 = scmp.eq.s32.totalorder %s20, 0
      %s23 = sadd.s32 %s22, 1
      %s24 = scalar_select %p21, %s22, %s23
      %p27 = pneg %p21
      %p28 = scmp.eq.s32.totalorder %s12, 1
      %p29 = por %p27, %p28
      %p30 = scmp.ne.s32.totalorder %s22, %s25
      %p31 = scmp.eq.s32.totalorder %s12, 0
      %p32 = por %p30, %p31
      %p33 = scmp.ne.s32.totalorder %s22, %s25
      %p34 = scmp.eq.s32.totalorder %s17, 1
      %p35 = por %p33, %p34
      %p36 = scmp.ne.s32.totalorder %s25, %s26
      %p37 = scmp.eq.s32.totalorder %s17, 0
      %p38 = por %p36, %p37
      %p39 = scmp.ne.s32.totalorder %s25, %s26
      %p40 = scmp.eq.s32.totalorder %s18, 1
      %p41 = por %p39, %p40
      %p43 = scmp.ne.s32.totalorder %s26, %s42
      %p44 = scmp.eq.s32.totalorder %s18, 0
      %p45 = por %p43, %p44
      %s47 = sadd.s32 %s46, 1
      %p50 = scmp.eq.s32.totalorder %s12, 1
      %p51 = scmp.ne.s32.totalorder %s46, %s48
      %p52 = scmp.eq.s32.totalorder %s12, 0
      %p53 = por %p51, %p52
      %p54 = scmp.ne.s32.totalorder %s46, %s48
      %p55 = scmp.eq.s32.totalorder %s17, 1
      %p56 = por %p54, %p55
      %p57 = scmp.ne.s32.totalorder %s48, %s49
      %p58 = scmp.eq.s32.totalorder %s17, 0
      %p59 = por %p57, %p58
      %p60 = scmp.ne.s32.totalorder %s48, %s49
      %p61 = scmp.eq.s32.totalorder %s18, 1
      %p62 = por %p60, %p61
      %p64 = scmp.ne.s32.totalorder %s49, %s63
      %p65 = scmp.eq.s32.totalorder %s18, 0
      %p66 = por %p64, %p65
      %s68 = sadd.s32 %s67, 1
      %p71 = scmp.eq.s32.totalorder %s12, 1
      %p72 = scmp.ne.s32.totalorder %s67, %s69
      %p73 = scmp.eq.s32.totalorder %s12, 0
      %p74 = por %p72, %p73
      %p75 = scmp.ne.s32.totalorder %s67, %s69
      %p76 = scmp.eq.s32.totalorder %s17, 1
      %p77 = por %p75, %p76
      %p78 = scmp.ne.s32.totalorder %s69, %s70
      %p79 = scmp.eq.s32.totalorder %s17, 0
      %p80 = por %p78, %p79
      %p81 = scmp.ne.s32.totalorder %s69, %s70
      %p82 = scmp.eq.s32.totalorder %s18, 1
      %p83 = por %p81, %p82
      %p85 = scmp.ne.s32.totalorder %s70, %s84
      %p86 = scmp.eq.s32.totalorder %s18, 0
      %p87 = por %p85, %p86
      %s88 = ssub.s32 %s12, %s19
      %p89 = scmp.eq.s32.totalorder %s88, 0
      %s91 = sadd.s32 %s90, 1
      %s92 = scalar_select %p89, %s90, %s91
      %p95 = pneg %p89
      %p96 = scmp.eq.s32.totalorder %s12, 1
      %p97 = por %p95, %p96
      %p98 = scmp.ne.s32.totalorder %s90, %s93
      %p99 = scmp.eq.s32.totalorder %s12, 0
      %p100 = por %p98, %p99
      %p101 = scmp.ne.s32.totalorder %s90, %s93
      %p102 = scmp.eq.s32.totalorder %s17, 1
      %p103 = por %p101, %p102
      %p104 = scmp.ne.s32.totalorder %s93, %s94
      %p105 = scmp.eq.s32.totalorder %s17, 0
      %p106 = por %p104, %p105
      %p107 = scmp.ne.s32.totalorder %s93, %s94
      %p108 = scmp.eq.s32.totalorder %s18, 1
      %p109 = por %p107, %p108
      %p111 = scmp.ne.s32.totalorder %s94, %s110
      %p112 = scmp.eq.s32.totalorder %s18, 0
      %p113 = por %p111, %p112
      %p114 = scmp.le.s32.totalorder 1, %s12
      %p115 = scmp.lt.s32.totalorder %s12, 3
      %p116 = pnand %p114, %p115
      %p117 = pneg %p116
      // Predicated region
      $region9: #{reader_forward.1} parent=5 // pred_check
        _
      $region10: #{reader_forward.1} parent=5 // pred_check_branch
        %119 = sbr.rel (%p116) target = $region12
      $region11: #{reader_forward.1} parent=5 // pred_region
        %s120 = ssub.s32 %s12, 1
        // Predicated region
        $region13: #{reader_forward.1} parent=11 // pred_check
          %p121 = pneg %p59
        $region14: #{reader_forward.1} parent=11 // pred_check_branch
          %123 = sbr.rel (%p121) target = $region16
        $region15: #{reader_forward.1} parent=11 // pred_region
          _
        $region16: #{reader_forward.1} parent=11 // pred_fallthru
          _
        // Predicated region
        $region17: #{reader_forward.1} parent=11 // pred_check
          %p124 = pneg %p80
        $region18: #{reader_forward.1} parent=11 // pred_check_branch
          %126 = sbr.rel (%p124) target = $region20
        $region19: #{reader_forward.1} parent=11 // pred_region
          _
        $region20: #{reader_forward.1} parent=11 // pred_fallthru
          _
      $region12: #{reader_forward.1} parent=5 // pred_fallthru
        _
      %p127 = scmp.lt.s32.totalorder %s12, 2
      // Predicated region
      $region21: #{reader_forward.1} parent=5 // pred_check
        %p128 = pneg %p127
      $region22: #{reader_forward.1} parent=5 // pred_check_branch
        %130 = sbr.rel (%p128) target = $region24
      $region23: #{reader_forward.1} parent=5 // pred_region
        // Predicated region
        $region25: #{reader_forward.1} parent=23 // pred_check
          %p131 = pneg %p32
        $region26: #{reader_forward.1} parent=23 // pred_check_branch
          %133 = sbr.rel (%p131) target = $region28
        $region27: #{reader_forward.1} parent=23 // pred_region
          %p134 = scmp.lt.s32.totalorder %s12, 1
          %s135 = scalar_select %p134, %s12, 1
          %s136 = smul.addr %s135, 4
          %s137 = scalar_lea.vmem %s0, %s136
        $region28: #{reader_forward.1} parent=23 // pred_fallthru
          _
      $region24: #{reader_forward.1} parent=5 // pred_fallthru
        _
      %p138 = scmp.le.s32.totalorder 1, %s12
      %p139 = scmp.lt.s32.totalorder %s12, 3
      %p140 = pnand %p138, %p139
      %p141 = pneg %p140
      // Predicated region
      $region29: #{reader_forward.1} parent=5 // pred_check
        _
      $region30: #{reader_forward.1} parent=5 // pred_check_branch
        %143 = sbr.rel (%p140) target = $region32
      $region31: #{reader_forward.1} parent=5 // pred_region
        %s144 = ssub.s32 %s12, 1
        %p145 = scmp.lt.s32.totalorder %s17, 1
        %s146 = scalar_select %p145, %s17, 1
        %s147 = smul.addr %s146, 4
        %s148 = scalar_lea.vmem %s0, %s147
        %p149 = pneg %p38
        %p150 = pneg %p35
        %p151 = pneg %p59
        %p152 = pneg %p56
        %p153 = pneg %p80
        %p154 = pneg %p77
        %p155 = pneg %p106
        %p156 = pneg %p103
        %s157 = sand.u32 %s93, 1
        %s158 = scalar_lea.sflag [#allocation3], %s157
        %s159 = sand.u32 %s93, 1
        %s160 = smul.addr %s159, 8
        %s161 = scalar_lea.vmem [#allocation2], %s160
        %p162 = scmp.lt.s32.totalorder %s17, 1
        %s163 = scalar_select %p162, %s17, 1
        %s164 = smul.addr %s163, 4
        %s165 = scalar_lea.vmem %s0, %s164
        %v167 = vld [vmem:[%s165] sm:$0xf]
        %v168 = vld [vmem:[%s1] sm:$0xf]
        %v169 = vld [vmem:[%s1 + $0x4] sm:$0xf]
        %v170 = vld [vmem:[%s1 + $0x8] sm:$0xf]
        %v171 = vld [vmem:[%s1 + $0xc] sm:$0xf]
        %v172 = vld [vmem:[%s2] sm:$0x1]
        %v174 = vlaneseq
        %v175 = vshrl.u32 %v174, 7
        %v176 = vsub.s32 0, %v175
        %v177 = vrot.slane %v172, %v176
        %v183 = vunpack.c.l.b16 %v168
        %v184 = vunpack.c.l.b16 %v169
        %v185 = vunpack.c.l.b16 %v170
        %v186 = vunpack.c.l.b16 %v171
        %v187 = vpack.c.b16 %v184, %v183
        %v188 = vpack.c.b16 %v186, %v185
        %vm191 = vcmask 261120
        %v193 = vsel %vm191, %v167, 0
        %195 = vmatprep.subr.bf16.mxu0 0
        %196 = vmatpush1.bf16.msra.mxu0 %v187
        %197 = vmatprep.subr.bf16.mxu0 0
        %198 = vmatpush1.bf16.msra.mxu0 %v188
        %199 = vmatprep.subr.bf16.mxu0 0
        %200 = vmatpush1.bf16.msra.mxu0 0
        %201 = vmatprep.subr.bf16.mxu0 0
        %202 = vmatpush1.bf16.msra.mxu0 0
        %203 = vmatprep.subr.bf16.mxu0 0
        %204 = vmatpush1.bf16.msra.mxu0 0
        %205 = vmatprep.subr.bf16.mxu0 0
        %206 = vmatpush1.bf16.msra.mxu0 0
        %207 = vmatprep.subr.bf16.mxu0 0
        %208 = vmatpush1.bf16.msra.mxu0 0
        %209 = vmatprep.subr.bf16.mxu0 0
        %210 = vmatpush1.bf16.msra.mxu0 0
        %211 = vmatprep.subr.bf16.mxu0 0
        %212 = vmatpush1.bf16.msra.mxu0 0
        %213 = vmatprep.subr.bf16.mxu0 0
        %214 = vmatpush1.bf16.msra.mxu0 0
        %215 = vmatprep.subr.bf16.mxu0 0
        %216 = vmatpush1.bf16.msra.mxu0 0
        %217 = vmatprep.subr.bf16.mxu0 0
        %218 = vmatpush1.bf16.msra.mxu0 0
        %219 = vmatprep.subr.bf16.mxu0 0
        %220 = vmatpush1.bf16.msra.mxu0 0
        %221 = vmatprep.subr.bf16.mxu0 0
        %222 = vmatpush1.bf16.msra.mxu0 0
        %223 = vmatprep.subr.bf16.mxu0 0
        %224 = vmatpush1.bf16.msra.mxu0 0
        %225 = vmatprep.subr.bf16.mxu0 0
        %226 = vmatpush1.bf16.msra.mxu0 0
        %227 = vmatprep.mubr.bf16.mxu0 0
        %228 = vmatmul.mubr.bf16.gmra.mrb[0].mxu0 %v193
        %v229 = vpop.f32.mrb[0].mxu0
        %v230 = vadd.f32 %v177, %v229
        %v231 = vpop.f32.mrb[0].mxu0
        %v232 = vpop.f32.mrb[0].mxu0
        %v233 = vpop.f32.mrb[0].mxu0
        %234 = vdwg.mxu0
        %235 = vst.msk [vmem:[%s161] sm:$0xff] %vm191, %v230
        %s236 = sand.u32 %s93, 1
        %s237 = scalar_lea.sflag [#allocation3], %s236
        %s238 = sand.u32 %s93, 1
        %s239 = smul.addr %s238, 8
        %s240 = scalar_lea.vmem [#allocation2], %s239
        // Predicated region
        $region33: #{reader_forward.1} parent=31 // pred_check
          %p241 = pneg %p103
        $region34: #{reader_forward.1} parent=31 // pred_check_branch
          %243 = sbr.rel (%p241) target = $region36
        $region35: #{reader_forward.1} parent=31 // pred_region
          %s245 = ssub.s32 128, 128
          %246 = vsyncadd %s237, %s245
          %s247 = smul.addr %s17, 128
          %s248 = scalar_lea.hbm %s3, %s247
          %s250 = sshll.u32 %s240, 4
          %s251 = int_to_ptr.vmem [resolvable:$true] %s250
          %253 = dma.vmem_to_hbm [thread:$0]  %s251, 128, %s248, %s237
        $region36: #{reader_forward.1} parent=31 // pred_fallthru
          _
      $region32: #{reader_forward.1} parent=5 // pred_fallthru
        _
      %p254 = scmp.le.s32.totalorder 2, %s12
      // Predicated region
      $region37: #{reader_forward.1} parent=5 // pred_check
        %p255 = pneg %p254
      $region38: #{reader_forward.1} parent=5 // pred_check_branch
        %257 = sbr.rel (%p255) target = $region40
      $region39: #{reader_forward.1} parent=5 // pred_region
        %s258 = ssub.s32 %s12, 2
        // Predicated region
        $region41: #{reader_forward.1} parent=39 // pred_check
          %p259 = pneg %p109
        $region42: #{reader_forward.1} parent=39 // pred_check_branch
          %261 = sbr.rel (%p259) target = $region44
        $region43: #{reader_forward.1} parent=39 // pred_region
          %s262 = sand.u32 %s94, 1
          %s263 = scalar_lea.sflag [#allocation3], %s262
          %s264 = sand.u32 %s94, 1
          %s265 = smul.addr %s264, 8
          %s266 = scalar_lea.vmem [#allocation2], %s265
          %267 = dma.done %s263, 128
        $region44: #{reader_forward.1} parent=39 // pred_fallthru
          _
      $region40: #{reader_forward.1} parent=5 // pred_fallthru
        _
    $region6: #{reader_forward.1} parent=1 // loop_footer
      %s16 = sadd.s32 1, %s12
    $region7: #{reader_forward.1} parent=1 // loop_footer_branch
      %11 = sbr.rel target = $region3
    $region8: #{reader_forward.1} parent=1 // loop_exit
      _
    %268 = vsyncpa [#allocation3], 1
    %s269 = scalar_lea.sflag [#allocation3], 1
    %270 = vsyncpa %s269, 1

</llo_original>
